<compile_context>
chip_gen: v7x
topology: tpu7x:2x2x1
jax: 0.10.0
libtpu: 0.0.40
codegen_flags: <defaults>
</compile_context>

<pallas_src>
import functools

import jax
import jax.numpy as jnp
from jax.experimental import pallas as pl
from jax.experimental.pallas import tpu as pltpu


def _dft_mag_kernel(x_ref, basis_ref, o_ref, *, kp, k_out):
    # x_ref: (1, L, TD) input dtype; basis_ref: (2*Kp, L) f32; o_ref: (1, K, TD) f32
    xb = x_ref[0].astype(jnp.float32)                         # (L, TD)
    res = jnp.dot(basis_ref[...], xb,
                  preferred_element_type=jnp.float32)         # (2*Kp, TD)
    re = res[:kp]                                             # (Kp, TD)
    im = res[kp:]                                             # (Kp, TD)
    mag = jnp.sqrt(re * re + im * im)                         # (Kp, TD)
    o_ref[0] = mag[:k_out]                                    # (K,  TD)


def dft_forward(x, *, d_block=None, vmem_budget_bytes=12 << 20):
    """abs(rfft(x, axis=2)) for real input x with rank >= 3 (FFT along axis 2)."""
    assert x.ndim >= 3, "DFT expects rank >= 3 input (FFT over axis 2)"
    squeeze_last = False
    if x.ndim == 3:                 # axis 2 is the last dim; add a unit lane dim
        x = x[..., None]
        squeeze_last = True

    N, C, L = int(x.shape[0]), int(x.shape[1]), int(x.shape[2])
    trailing = x.shape[3:]
    D = 1
    for t in trailing:
        D *= int(t)
    K = L // 2 + 1
    Kp = ((K + 7) // 8) * 8         # sublane-aligned re/im split point

    # Fused rfft basis as the matmul LHS:
    #   rows [0, K)       -> cos(2*pi*k*n/L)   (real part)
    #   rows [Kp, Kp + K) -> -sin(2*pi*k*n/L)  (imag part)
    n = jnp.arange(L, dtype=jnp.int32)[None, :]
    k = jnp.arange(K, dtype=jnp.int32)[:, None]
    nk = (k * n) % L                                          # exact mod-L reduction
    ang = (2.0 * jnp.pi / L) * nk.astype(jnp.float32)         # angle in [0, 2*pi)
    basis = jnp.zeros((2 * Kp, L), jnp.float32)
    basis = basis.at[:K].set(jnp.cos(ang)).at[Kp:Kp + K].set(-jnp.sin(ang))

    # Contiguous reshape only (no transpose, no extra HBM pass).
    NC = N * C
    x3 = x.reshape(NC, L, D)

    # D tile: full D when small, else a lane-dense multiple of 128 sized so the
    # double-buffered working set stays well under the scoped VMEM default on
    # every generation (v5e 16 MiB / v6e 32 MiB / v7x 32 of 64 MiB).
    if d_block is None:
        if D <= 256:
            TD = D
        else:
            in_isz = x3.dtype.itemsize
            basis_bytes = 2 * (2 * Kp * L * 4)                # double-buffered LHS
            per_lane = 2 * (L * in_isz + K * 4)               # dbl-buffered x + out
            avail = max(vmem_budget_bytes - basis_bytes, per_lane * 128)
            TD = int(max(128, min(1024, (avail // per_lane) // 128 * 128)))
            TD = min(TD, ((D + 127) // 128) * 128)
    else:
        TD = int(d_block)

    grid = (NC, pl.cdiv(D, TD))

    out = pl.pallas_call(
        functools.partial(_dft_mag_kernel, kp=Kp, k_out=K),
        out_shape=jax.ShapeDtypeStruct((NC, K, D), jnp.float32),
        grid=grid,
        in_specs=[
            pl.BlockSpec((1, L, TD), lambda s, d: (s, 0, d)),     # x slab tile
            pl.BlockSpec((2 * Kp, L), lambda s, d: (0, 0)),       # shared fused basis
        ],
        out_specs=pl.BlockSpec((1, K, TD), lambda s, d: (s, 0, d)),
        compiler_params=pltpu.CompilerParams(
            dimension_semantics=("parallel", "parallel")),
    )(x3, basis)

    out = out.reshape((N, C, K) + tuple(trailing))
    if squeeze_last:
        out = out[..., 0]
    return out


if __name__ == "__main__":
    key = jax.random.PRNGKey(0)
    N, C, L, D = 2, 4, 16, 32
    x = jax.random.normal(key, (N, C, L, D), dtype=jnp.float32)

    out = jax.block_until_ready(dft_forward(x))

    expected = jnp.abs(jnp.fft.rfft(x, axis=2))
    assert out.shape == expected.shape, (out.shape, expected.shape)
    # DEFAULT MXU precision (single bf16 pass, f32 accumulate) per the perf
    # review; tolerance sized for bf16 operand rounding at L=16.
    assert jnp.allclose(out, expected, rtol=2e-2, atol=3e-2), float(
        jnp.max(jnp.abs(out - expected)))

    print("KERNEL_OK")
</pallas_src>

<mosaic_0001>
module attributes {stable_mosaic.version = 11 : i64} {
  func.func @_dft_mag_kernel(%arg0: i32, %arg1: i32, %arg2: memref<1x16x32xf32, #tpu.memory_space<vmem>>, %arg3: memref<32x16xf32, #tpu.memory_space<vmem>>, %arg4: memref<1x9x32xf32, #tpu.memory_space<vmem>>) attributes {dimension_semantics = [#tpu.dimension_semantics<parallel>, #tpu.dimension_semantics<parallel>], iteration_bounds = array<i64: 8, 1>, scalar_prefetch = 0 : i64, scratch_operands = 0 : i64, tpu.core_type = #tpu.core_type<tc>, window_params = [{transform_indices = @transform_0, window_bounds = array<i64: 1, 16, 32>}, {pipeline_mode = #tpu.pipeline_mode<synchronous>, transform_indices = @transform_1, window_bounds = array<i64: 32, 16>}, {transform_indices = @transform_2, window_bounds = array<i64: 1, 9, 32>}]} {
    %c0 = arith.constant 0 : index
    %c0_0 = arith.constant 0 : index
    %c0_1 = arith.constant 0 : index
    %0 = vector.load %arg2[%c0, %c0_0, %c0_1] : memref<1x16x32xf32, #tpu.memory_space<vmem>>, vector<1x16x32xf32>
    %1 = vector.shape_cast %0 : vector<1x16x32xf32> to vector<16x32xf32>
    %c0_2 = arith.constant 0 : index
    %c0_3 = arith.constant 0 : index
    %2 = vector.load %arg3[%c0_2, %c0_3] : memref<32x16xf32, #tpu.memory_space<vmem>>, vector<32x16xf32>
    %cst = arith.constant dense<0.000000e+00> : vector<32x32xf32>
    %3 = tpu.matmul %2, %1, %cst {dimension_numbers = #tpu.dot_dimension_numbers<[1], [0], [0], [1], [0, 0, 1, 1], [], []>} : vector<32x16xf32>, vector<16x32xf32>, vector<32x32xf32> -> vector<32x32xf32>
    %4 = vector.extract_strided_slice %3 {offsets = [0, 0], sizes = [16, 32], strides = [1, 1]} : vector<32x32xf32> to vector<16x32xf32>
    %5 = vector.extract_strided_slice %3 {offsets = [16, 0], sizes = [16, 32], strides = [1, 1]} : vector<32x32xf32> to vector<16x32xf32>
    %6 = arith.mulf %4, %4 : vector<16x32xf32>
    %7 = arith.mulf %5, %5 : vector<16x32xf32>
    %8 = arith.addf %6, %7 : vector<16x32xf32>
    %9 = math.sqrt %8 : vector<16x32xf32>
    %10 = vector.extract_strided_slice %9 {offsets = [0, 0], sizes = [9, 32], strides = [1, 1]} : vector<16x32xf32> to vector<9x32xf32>
    %c0_4 = arith.constant 0 : index
    %c0_5 = arith.constant 0 : index
    %c0_6 = arith.constant 0 : index
    %11 = vector.load %arg4[%c0_4, %c0_5, %c0_6] : memref<1x9x32xf32, #tpu.memory_space<vmem>>, vector<1x9x32xf32>
    %12 = vector.shape_cast %11 : vector<1x9x32xf32> to vector<9x32xf32>
    %13 = vector.shape_cast %10 : vector<9x32xf32> to vector<1x9x32xf32>
    tpu.vector_store %arg4[%c0_4, %c0_5, %c0_6], %13 {strides = array<i32>} : memref<1x9x32xf32, #tpu.memory_space<vmem>>, vector<1x9x32xf32>,
    return
  }
  func.func @transform_0(%arg0: i32, %arg1: i32) -> (i32, i32, i32) {
    %c0_i32 = arith.constant 0 : i32
    %c0_i32_0 = arith.constant 0 : i32
    return %arg0, %c0_i32, %arg1 : i32, i32, i32
  }
  func.func @transform_1(%arg0: i32, %arg1: i32) -> (i32, i32) {
    %c0_i32 = arith.constant 0 : i32
    %c0_i32_0 = arith.constant 0 : i32
    %c0_i32_1 = arith.constant 0 : i32
    return %c0_i32, %c0_i32_0 : i32, i32
  }
  func.func @transform_2(%arg0: i32, %arg1: i32) -> (i32, i32, i32) {
    %c0_i32 = arith.constant 0 : i32
    %c0_i32_0 = arith.constant 0 : i32
    return %arg0, %c0_i32, %arg1 : i32, i32, i32
  }
}

</mosaic_0001>

<llo_original>
// kernel: tpu_custom_call.1
$region0: #{tpu_custom_call.1}
  #allocation0 [shape = 'u32[]', space=smem, size = 0x4, offset = 0x4, fixed_abs, tag = 'smem constant byte address 0x4 - core index']
  #allocation1 [shape = 'u32[144,128]{1,0:T(1,128)}', space=vmem, size = 0x12000, scoped, tag = 'internal scratch']
  %s0 = inlined_call_operand.hbm [shape: f32[8,16,32], index: 0, kind: input, shape index: {}]
  %s1 = inlined_call_operand.vmem [shape: f32[32,16], index: 1, kind: input, shape index: {}]
  %s2 = inlined_call_operand.vmem [shape: f32[8,9,32], index: 2, kind: output, shape index: {}]
  %s3 = sld [smem:[#allocation0]]
  $region45: #{tpu_custom_call.1} parent=0
    _
  %s5 = ssub.s32 1, %s3
  %s6 = scalar_select 0, %s5, %s3
  $region1: #{tpu_custom_call.1} parent=0
    #allocation2 [shape = 'u8[16384]{0}', space=vmem, size = 0x4000, scoped, tag = 'input window, operand 0']
    #allocation3 [shape = 's32[2]{0}', space=sflag, size = 0x8, scoped, tag = 'scoped memory for tpu_custom_call.1']
    %7 = vsyncpa [#allocation3], 0
    %s8 = scalar_lea.sflag [#allocation3], 1
    %9 = vsyncpa %s8, 0
    loop: start=0, step=1, limit=10
    $region2: #{tpu_custom_call.1} parent=1 // loop_pre_header
      _
    $region3: #{tpu_custom_call.1} parent=1 // loop_header
      %s11 = sphi 0, %s15
      %p12 = scmp.ge.s32.totalorder %s11, 10
      %s18 = sphi 0, %s30
      %s19 = sphi 0, %s26
      %s20 = sphi 0, %s18
      %s21 = sphi 0, %s19
      %s22 = sphi 0, %s20
      %s23 = sphi 0, %s21
      %s35 = sphi 0, %s37
      %s38 = sphi 0, %s35
      %s39 = sphi 0, %s38
      %s55 = sphi 0, %s39
      %s59 = sphi 0, %s59
      %s61 = sphi 0, %s59
      %s62 = sphi 0, %s61
      %s76 = sphi 0, %s62
      %s84 = sphi 0, %s86
      %s87 = sphi 0, %s84
      %s88 = sphi 0, %s87
      %s104 = sphi 0, %s88
    $region4: #{tpu_custom_call.1} parent=1 // loop_header_branch
      %14 = sbr.rel (%p12) target = $region8
    $region5: #{tpu_custom_call.1} parent=1 // loop_body
      %s16 = ssub.s32 %s11, 1
      %s17 = ssub.s32 %s11, 2
      %s24 = sadd.s32 1, %s19
      %p25 = scmp.ge.s32.totalorder %s24, 1
      %s26 = scalar_select %p25, 0, %s24
      %s27 = sadd.s32 1, %s18
      %s28 = scalar_select %p25, %s27, %s18
      %p29 = scmp.ge.s32.totalorder %s28, 8
      %s30 = scalar_select %p29, 0, %s28
      %s31 = ssub.s32 %s18, %s30
      %s32 = ssub.s32 %s19, %s26
      %s33 = sor.u32 %s31, %s32
      %p34 = scmp.eq.s32.totalorder %s33, 0
      %s36 = sadd.s32 %s35, 1
      %s37 = scalar_select %p34, %s35, %s36
      %p40 = pneg %p34
      %p41 = scmp.eq.s32.totalorder %s11, 7
      %p42 = por %p40, %p41
      %p43 = scmp.ne.s32.totalorder %s35, %s38
      %p44 = scmp.eq.s32.totalorder %s11, 0
      %p45 = por %p43, %p44
      %p46 = scmp.ne.s32.totalorder %s35, %s38
      %p47 = scmp.eq.s32.totalorder %s16, 7
      %p48 = por %p46, %p47
      %p49 = scmp.ne.s32.totalorder %s38, %s39
      %p50 = scmp.eq.s32.totalorder %s16, 0
      %p51 = por %p49, %p50
      %p52 = scmp.ne.s32.totalorder %s38, %s39
      %p53 = scmp.eq.s32.totalorder %s17, 7
      %p54 = por %p52, %p53
      %p56 = scmp.ne.s32.totalorder %s39, %s55
      %p57 = scmp.eq.s32.totalorder %s17, 0
      %p58 = por %p56, %p57
      %s60 = sadd.s32 %s59, 1
      %p63 = scmp.eq.s32.totalorder %s11, 7
      %p64 = scmp.ne.s32.totalorder %s59, %s61
      %p65 = scmp.eq.s32.totalorder %s11, 0
      %p66 = por %p64, %p65
      %p67 = scmp.ne.s32.totalorder %s59, %s61
      %p68 = scmp.eq.s32.totalorder %s16, 7
      %p69 = por %p67, %p68
      %p70 = scmp.ne.s32.totalorder %s61, %s62
      %p71 = scmp.eq.s32.totalorder %s16, 0
      %p72 = por %p70, %p71
      %p73 = scmp.ne.s32.totalorder %s61, %s62
      %p74 = scmp.eq.s32.totalorder %s17, 7
      %p75 = por %p73, %p74
      %p77 = scmp.ne.s32.totalorder %s62, %s76
      %p78 = scmp.eq.s32.totalorder %s17, 0
      %p79 = por %p77, %p78
      %s80 = ssub.s32 %s18, %s30
      %s81 = ssub.s32 %s19, %s26
      %s82 = sor.u32 %s80, %s81
      %p83 = scmp.eq.s32.totalorder %s82, 0
      %s85 = sadd.s32 %s84, 1
      %s86 = scalar_select %p83, %s84, %s85
      %p89 = pneg %p83
      %p90 = scmp.eq.s32.totalorder %s11, 7
      %p91 = por %p89, %p90
      %p92 = scmp.ne.s32.totalorder %s84, %s87
      %p93 = scmp.eq.s32.totalorder %s11, 0
      %p94 = por %p92, %p93
      %p95 = scmp.ne.s32.totalorder %s84, %s87
      %p96 = scmp.eq.s32.totalorder %s16, 7
      %p97 = por %p95, %p96
      %p98 = scmp.ne.s32.totalorder %s87, %s88
      %p99 = scmp.eq.s32.totalorder %s16, 0
      %p100 = por %p98, %p99
      %p101 = scmp.ne.s32.totalorder %s87, %s88
      %p102 = scmp.eq.s32.totalorder %s17, 7
      %p103 = por %p101, %p102
      %p105 = scmp.ne.s32.totalorder %s88, %s104
      %p106 = scmp.eq.s32.totalorder %s17, 0
      %p107 = por %p105, %p106
      %p108 = scmp.le.s32.totalorder 1, %s11
      %p109 = scmp.lt.s32.totalorder %s11, 9
      %p110 = pnand %p108, %p109
      %p111 = pneg %p110
      // Predicated region
      $region9: #{tpu_custom_call.1} parent=5 // pred_check
        _
      $region10: #{tpu_custom_call.1} parent=5 // pred_check_branch
        %113 = sbr.rel (%p110) target = $region12
      $region11: #{tpu_custom_call.1} parent=5 // pred_region
        %s114 = ssub.s32 %s11, 1
        // Predicated region
        $region13: #{tpu_custom_call.1} parent=11 // pred_check
          %p115 = pneg %p72
        $region14: #{tpu_custom_call.1} parent=11 // pred_check_branch
          %117 = sbr.rel (%p115) target = $region16
        $region15: #{tpu_custom_call.1} parent=11 // pred_region
          _
        $region16: #{tpu_custom_call.1} parent=11 // pred_fallthru
          _
      $region12: #{tpu_custom_call.1} parent=5 // pred_fallthru
        _
      %p118 = scmp.lt.s32.totalorder %s11, 8
      // Predicated region
      $region17: #{tpu_custom_call.1} parent=5 // pred_check
        %p119 = pneg %p118
      $region18: #{tpu_custom_call.1} parent=5 // pred_check_branch
        %121 = sbr.rel (%p119) target = $region20
      $region19: #{tpu_custom_call.1} parent=5 // pred_region
        // Predicated region
        $region21: #{tpu_custom_call.1} parent=19 // pred_check
          %p122 = pneg %p45
        $region22: #{tpu_custom_call.1} parent=19 // pred_check_branch
          %124 = sbr.rel (%p122) target = $region24
        $region23: #{tpu_custom_call.1} parent=19 // pred_region
          %s125 = sand.u32 %s35, 1
          %s126 = scalar_lea.sflag [#allocation3], %s125
          %s127 = sand.u32 %s35, 1
          %s128 = smul.addr %s127, 16
          %s129 = scalar_lea.vmem [#allocation2], %s128
          %s131 = ssub.s32 256, 256
          %132 = vsyncadd %s126, %s131
          %s133 = smul.addr %s18, 2
          %s134 = sadd.s32 %s19, %s133
          %s135 = smul.addr %s134, 128
          %s136 = scalar_lea.hbm %s0, %s135
          %s137 = sshll.u32 %s129, 4
          %s138 = int_to_ptr.vmem [resolvable:$true] %s137
          %143 = dma.hbm_to_vmem [thread:$0]  %s136, 256, %s138, %s126, 128, 128, 8
        $region24: #{tpu_custom_call.1} parent=19 // pred_fallthru
          _
      $region20: #{tpu_custom_call.1} parent=5 // pred_fallthru
        _
      %p144 = scmp.le.s32.totalorder 1, %s11
      %p145 = scmp.lt.s32.totalorder %s11, 9
      %p146 = pnand %p144, %p145
      %p147 = pneg %p146
      // Predicated region
      $region25: #{tpu_custom_call.1} parent=5 // pred_check
        _
      $region26: #{tpu_custom_call.1} parent=5 // pred_check_branch
        %149 = sbr.rel (%p146) target = $region28
      $region27: #{tpu_custom_call.1} parent=5 // pred_region
        %s150 = ssub.s32 %s11, 1
        %s151 = sand.u32 %s38, 1
        %s152 = scalar_lea.sflag [#allocation3], %s151
        %s153 = sand.u32 %s38, 1
        %s154 = smul.addr %s153, 16
        %s155 = scalar_lea.vmem [#allocation2], %s154
        // Predicated region
        $region29: #{tpu_custom_call.1} parent=27 // pred_check
          %p156 = pneg %p51
        $region30: #{tpu_custom_call.1} parent=27 // pred_check_branch
          %158 = sbr.rel (%p156) target = $region32
        $region31: #{tpu_custom_call.1} parent=27 // pred_region
          %159 = dma.done %s152, 256
        $region32: #{tpu_custom_call.1} parent=27 // pred_fallthru
          _
        %s160 = sand.u32 %s38, 1
        %s161 = scalar_lea.sflag [#allocation3], %s160
        %s162 = sand.u32 %s38, 1
        %s163 = smul.addr %s162, 16
        %s164 = scalar_lea.vmem [#allocation2], %s163
        %p165 = pneg %p51
        %p166 = pneg %p48
        %p167 = pneg %p72
        %p168 = pneg %p69
        %p169 = pneg %p100
        %p170 = pneg %p97
        %p171 = scmp.lt.s32.totalorder %s20, 7
        %s172 = scalar_select %p171, %s20, 7
        %p173 = scmp.lt.s32.totalorder %s21, 0
        %s174 = scalar_select %p173, %s21, 0
        %s175 = smul.addr %s172, 2
        %s176 = sadd.s32 %s174, %s175
        %s177 = smul.addr %s176, 8
        %s178 = scalar_lea.vmem %s2, %s177
        %p179 = scmp.lt.s32.totalorder %s20, 7
        %s180 = scalar_select %p179, %s20, 7
        %p181 = scmp.lt.s32.totalorder %s21, 0
        %s182 = scalar_select %p181, %s21, 0
        %s183 = smul.addr %s180, 2
        %s184 = sadd.s32 %s182, %s183
        %s185 = smul.addr %s184, 8
        %s186 = scalar_lea.vmem %s2, %s185
        %v187 = vld [vmem:[%s155] sm:$0xff]
        %v188 = vld [vmem:[%s155 + $0x8] sm:$0xff]
        %v189 = vld [vmem:[%s1] sm:$0xff]
        %v190 = vld [vmem:[%s1 + $0x8] sm:$0xff]
        %v191 = vld [vmem:[%s1 + $0x10] sm:$0xff]
        %v192 = vld [vmem:[%s1 + $0x18] sm:$0xff]
        %vm193 = vcmask 130048
        %v195 = vsel %vm193, %v189, 0
        %v198 = vsel %vm193, %v190, 0
        %v201 = vsel %vm193, %v191, 0
        %v204 = vsel %vm193, %v192, 0
        %206 = vmatprep.subr.mxu0 0.0
        %207 = vmatpush1.msra.mxu0 %v187
        %208 = vmatprep.subr.mxu0 0.0
        %209 = vmatpush1.msra.mxu0 %v188
        %210 = vmatprep.subr.mxu0 0.0
        %211 = vmatpush1.msra.mxu0 0.0
        %212 = vmatprep.subr.mxu0 0.0
        %213 = vmatpush1.msra.mxu0 0.0
        %214 = vmatprep.subr.mxu0 0.0
        %215 = vmatpush1.msra.mxu0 0.0
        %216 = vmatprep.subr.mxu0 0.0
        %217 = vmatpush1.msra.mxu0 0.0
        %218 = vmatprep.subr.mxu0 0.0
        %219 = vmatpush1.msra.mxu0 0.0
        %220 = vmatprep.subr.mxu0 0.0
        %221 = vmatpush1.msra.mxu0 0.0
        %222 = vmatprep.subr.mxu0 0.0
        %223 = vmatpush1.msra.mxu0 0.0
        %224 = vmatprep.subr.mxu0 0.0
        %225 = vmatpush1.msra.mxu0 0.0
        %226 = vmatprep.subr.mxu0 0.0
        %227 = vmatpush1.msra.mxu0 0.0
        %228 = vmatprep.subr.mxu0 0.0
        %229 = vmatpush1.msra.mxu0 0.0
        %230 = vmatprep.subr.mxu0 0.0
        %231 = vmatpush1.msra.mxu0 0.0
        %232 = vmatprep.subr.mxu0 0.0
        %233 = vmatpush1.msra.mxu0 0.0
        %234 = vmatprep.subr.mxu0 0.0
        %235 = vmatpush1.msra.mxu0 0.0
        %236 = vmatprep.subr.mxu0 0.0
        %237 = vmatpush1.msra.mxu0 0.0
        %238 = vmatprep.subr.mxu0 0.0
        %239 = vmatpush1.msra.mxu0 0.0
        %240 = vmatprep.subr.mxu0 0.0
        %241 = vmatpush1.msra.mxu0 0.0
        %242 = vmatprep.subr.mxu0 0.0
        %243 = vmatpush1.msra.mxu0 0.0
        %244 = vmatprep.subr.mxu0 0.0
        %245 = vmatpush1.msra.mxu0 0.0
        %246 = vmatprep.subr.mxu0 0.0
        %247 = vmatpush1.msra.mxu0 0.0
        %248 = vmatprep.subr.mxu0 0.0
        %249 = vmatpush1.msra.mxu0 0.0
        %250 = vmatprep.subr.mxu0 0.0
        %251 = vmatpush1.msra.mxu0 0.0
        %252 = vmatprep.subr.mxu0 0.0
        %253 = vmatpush1.msra.mxu0 0.0
        %254 = vmatprep.subr.mxu0 0.0
        %255 = vmatpush1.msra.mxu0 0.0
        %256 = vmatprep.subr.mxu0 0.0
        %257 = vmatpush1.msra.mxu0 0.0
        %258 = vmatprep.subr.mxu0 0.0
        %259 = vmatpush1.msra.mxu0 0.0
        %260 = vmatprep.subr.mxu0 0.0
        %261 = vmatpush1.msra.mxu0 0.0
        %262 = vmatprep.subr.mxu0 0.0
        %263 = vmatpush1.msra.mxu0 0.0
        %264 = vmatprep.subr.mxu0 0.0
        %265 = vmatpush1.msra.mxu0 0.0
        %266 = vmatprep.subr.mxu0 0.0
        %267 = vmatpush1.msra.mxu0 0.0
        %268 = vmatprep.subr.mxu0 0.0
        %269 = vmatpush1.msra.mxu0 0.0
        %270 = vmatprep.mubr.f32.mxu0 0.0
        %271 = vmatmul.mubr.f32.gmra.mrb[0].mxu0 %v195
        %v272 = vpop.f32.mrb[0].mxu0
        %v273 = vadd.f32 0.0, %v272
        %v274 = vpop.f32.mrb[0].mxu0
        %275 = vmatprep.mubr.f32.mxu0 0.0
        %276 = vmatmul.mubr.f32.gmra.mrb[0].mxu0 %v198
        %v277 = vpop.f32.mrb[0].mxu0
        %v278 = vadd.f32 0.0, %v277
        %v279 = vpop.f32.mrb[0].mxu0
        %280 = vmatprep.mubr.f32.mxu0 0.0
        %281 = vmatmul.mubr.f32.gmra.mrb[0].mxu0 %v201
        %v282 = vpop.f32.mrb[0].mxu0
        %v283 = vadd.f32 0.0, %v282
        %v284 = vpop.f32.mrb[0].mxu0
        %285 = vmatprep.mubr.f32.mxu0 0.0
        %286 = vmatmul.mubr.f32.gmra.mrb[0].mxu0 %v204
        %v287 = vpop.f32.mrb[0].mxu0
        %v288 = vadd.f32 0.0, %v287
        %v289 = vpop.f32.mrb[0].mxu0
        %290 = vdwg.mxu0
        %v291 = vmul.f32 %v273, %v273
        %v292 = vmul.f32 %v278, %v278
        %v293 = vmul.f32 %v283, %v283
        %v294 = vmul.f32 %v288, %v288
        %v295 = vadd.f32 %v291, %v293
        %v296 = vadd.f32 %v292, %v294
        %v297 = vrsqrt.pop %v295
        %v298 = vmul.f32 %v295, %v297
        %vm299 = vcmp.eq.f32.partialorder %v295, inf
        %v300 = vsel %vm299, %v295, %v298
        %vm301 = vcmp.eq.f32.partialorder %v295, 0.0
        %v302 = vand.u32 %v295, 2147483648
        %v303 = vsel %vm301, %v302, %v300
        %v304 = vrsqrt.pop %v296
        %v305 = vmul.f32 %v296, %v304
        %vm306 = vcmp.eq.f32.partialorder %v296, inf
        %v307 = vsel %vm306, %v296, %v305
        %vm308 = vcmp.eq.f32.partialorder %v296, 0.0
        %v309 = vand.u32 %v296, 2147483648
        %v310 = vsel %vm308, %v309, %v307
        %vm311 = vcmask 261120
        %312 = vst.msk [vmem:[%s186] sm:$0xff] %vm311, %v303
        %vm313 = vcmask 253952
        %314 = vst.msk [vmem:[%s186 + $0x8] sm:$0x1] %vm313, %v310
        %p315 = scmp.lt.s32.totalorder %s20, 7
        %s316 = scalar_select %p315, %s20, 7
        %p317 = scmp.lt.s32.totalorder %s21, 0
        %s318 = scalar_select %p317, %s21, 0
        %s319 = smul.addr %s316, 2
        %s320 = sadd.s32 %s318, %s319
        %s321 = smul.addr %s320, 8
        %s322 = scalar_lea.vmem %s2, %s321
        // Predicated region
        $region33: #{tpu_custom_call.1} parent=27 // pred_check
          %p323 = pneg %p97
        $region34: #{tpu_custom_call.1} parent=27 // pred_check_branch
          %325 = sbr.rel (%p323) target = $region36
        $region35: #{tpu_custom_call.1} parent=27 // pred_region
          _
        $region36: #{tpu_custom_call.1} parent=27 // pred_fallthru
          _
      $region28: #{tpu_custom_call.1} parent=5 // pred_fallthru
        _
      %p326 = scmp.le.s32.totalorder 2, %s11
      // Predicated region
      $region37: #{tpu_custom_call.1} parent=5 // pred_check
        %p327 = pneg %p326
      $region38: #{tpu_custom_call.1} parent=5 // pred_check_branch
        %329 = sbr.rel (%p327) target = $region40
      $region39: #{tpu_custom_call.1} parent=5 // pred_region
        %s330 = ssub.s32 %s11, 2
        // Predicated region
        $region41: #{tpu_custom_call.1} parent=39 // pred_check
          %p331 = pneg %p103
        $region42: #{tpu_custom_call.1} parent=39 // pred_check_branch
          %333 = sbr.rel (%p331) target = $region44
        $region43: #{tpu_custom_call.1} parent=39 // pred_region
          %p334 = scmp.lt.s32.totalorder %s22, 7
          %s335 = scalar_select %p334, %s22, 7
          %p336 = scmp.lt.s32.totalorder %s23, 0
          %s337 = scalar_select %p336, %s23, 0
          %s338 = smul.addr %s335, 2
          %s339 = sadd.s32 %s337, %s338
          %s340 = smul.addr %s339, 8
          %s341 = scalar_lea.vmem %s2, %s340
        $region44: #{tpu_custom_call.1} parent=39 // pred_fallthru
          _
      $region40: #{tpu_custom_call.1} parent=5 // pred_fallthru
        _
    $region6: #{tpu_custom_call.1} parent=1 // loop_footer
      %s15 = sadd.s32 1, %s11
    $region7: #{tpu_custom_call.1} parent=1 // loop_footer_branch
      %10 = sbr.rel target = $region3
    $region8: #{tpu_custom_call.1} parent=1 // loop_exit
      _
    %342 = vsyncpa [#allocation3], 1
    %s343 = scalar_lea.sflag [#allocation3], 1
    %344 = vsyncpa %s343, 1

</llo_original>
